<compile_context>
chip_gen: v7x
topology: tpu7x:2x2x1
jax: 0.10.0
libtpu: 0.0.40
codegen_flags: <defaults>
</compile_context>

<pallas_src>
import functools
import math

import jax
import jax.numpy as jnp
from jax import lax
from jax.experimental import pallas as pl
from jax.experimental.pallas import tpu as pltpu

EPS = 1e-5
_INV_SQRT2 = 1.0 / math.sqrt(2.0)


def _gelu(x):
    # exact (erf-based) GELU, matching torch.nn.GELU() default
    return 0.5 * x * (1.0 + lax.erf(x * jnp.float32(_INV_SQRT2)))


# --------------------- pass 1: batch statistics over row tiles ---------------------
def bn_stats_kernel(x_ref, stats_ref):
    @pl.when(pl.program_id(0) == 0)
    def _():
        stats_ref[...] = jnp.zeros_like(stats_ref)

    x = x_ref[...]
    s = jnp.sum(x, axis=0, keepdims=True)          # [1, IN]
    sq = jnp.sum(x * x, axis=0, keepdims=True)     # [1, IN]
    stats_ref[...] += jnp.concatenate([s, sq], axis=0)


# ------------- pass 2: BatchNorm -> Linear -> activation (-> +skip) per tile -------------
def linear_layer_kernel(x_ref, stats_ref, gamma_ref, beta_ref, w_ref, b_ref, out_ref,
                        *, n_rows, activation, apply_skip):
    inv_n = jnp.float32(1.0 / n_rows)
    mean = stats_ref[0:1, :] * inv_n
    var = stats_ref[1:2, :] * inv_n - mean * mean          # biased variance (train mode)
    scale = gamma_ref[...] * lax.rsqrt(var + jnp.float32(EPS))
    shift = beta_ref[...] - mean * scale

    y = x_ref[...] * scale + shift                          # BatchNorm1d output
    z = jnp.dot(y, w_ref[...], preferred_element_type=jnp.float32) + b_ref[...]
    if activation == "gelu":
        z = _gelu(z)
    out_ref[...] = (y + z) if apply_skip else z


# ------------------------------------ wrapper ------------------------------------
def linear_layer_forward(x, gamma, beta, weight, bias, *,
                         activation="gelu", apply_skip=False, tile_rows=128):
    """Pallas LinearLayer forward. weight is the torch [out, in] matrix."""
    n, in_f = x.shape
    out_f, in_f2 = weight.shape
    assert in_f == in_f2
    if apply_skip:
        assert in_f == out_f, "skip connection requires in_features == out_features"
    if n < tile_rows:
        tile_rows = n
    assert n % tile_rows == 0, "node/batch count must be a multiple of the row tile"
    n_tiles = n // tile_rows

    # layout-only prep (no heavy compute hidden in the wrapper)
    w_t = weight.T.astype(jnp.float32)              # [IN, OUT]
    gamma2 = gamma.reshape(1, in_f).astype(jnp.float32)
    beta2 = beta.reshape(1, in_f).astype(jnp.float32)
    bias2 = bias.reshape(1, out_f).astype(jnp.float32)
    x = x.astype(jnp.float32)

    # ---- pass 1: per-feature sum / sumsq, accumulated across the row-tile grid ----
    stats = pl.pallas_call(
        bn_stats_kernel,
        out_shape=jax.ShapeDtypeStruct((2, in_f), jnp.float32),
        grid=(n_tiles,),
        in_specs=[pl.BlockSpec((tile_rows, in_f), lambda t: (t, 0))],
        out_specs=pl.BlockSpec((2, in_f), lambda t: (0, 0)),       # resident accumulator
        compiler_params=pltpu.CompilerParams(dimension_semantics=("arbitrary",)),
        cost_estimate=pl.CostEstimate(flops=3 * n * in_f,
                                      transcendentals=0,
                                      bytes_accessed=4 * (n * in_f + 2 * in_f)),
    )(x)

    # ---- pass 2: normalize + matmul + activation (+ skip), row tiles in parallel ----
    kernel = functools.partial(linear_layer_kernel, n_rows=n,
                               activation=activation, apply_skip=apply_skip)
    flops = 2 * n * in_f * out_f + 6 * n * in_f
    transc = n * out_f if activation == "gelu" else 0
    bytes_accessed = 4 * (n * in_f + in_f * out_f + n * out_f + 5 * in_f + out_f)

    out = pl.pallas_call(
        kernel,
        out_shape=jax.ShapeDtypeStruct((n, out_f), jnp.float32),
        grid=(n_tiles,),
        in_specs=[
            pl.BlockSpec((tile_rows, in_f), lambda t: (t, 0)),     # streamed row tile
            pl.BlockSpec((2, in_f), lambda t: (0, 0)),             # stats (resident)
            pl.BlockSpec((1, in_f), lambda t: (0, 0)),             # gamma (resident)
            pl.BlockSpec((1, in_f), lambda t: (0, 0)),             # beta  (resident)
            pl.BlockSpec((in_f, out_f), lambda t: (0, 0)),         # weight (resident)
            pl.BlockSpec((1, out_f), lambda t: (0, 0)),            # bias   (resident)
        ],
        out_specs=pl.BlockSpec((tile_rows, out_f), lambda t: (t, 0)),
        compiler_params=pltpu.CompilerParams(
            dimension_semantics=("parallel",),                     # megacore on v7x
            vmem_limit_bytes=64 * 1024 * 1024),
        cost_estimate=pl.CostEstimate(flops=flops, transcendentals=transc,
                                      bytes_accessed=bytes_accessed),
    )(x, stats, gamma2, beta2, w_t, bias2)
    return out


# ----------------------- plain-JAX reference (torch semantics) -----------------------
def reference_forward(x, gamma, beta, weight, bias, *, activation="gelu", apply_skip=False):
    m = jnp.mean(x, axis=0, keepdims=True)
    v = jnp.mean((x - m) ** 2, axis=0, keepdims=True)               # biased variance
    y = (x - m) / jnp.sqrt(v + EPS) * gamma + beta
    z = y @ weight.T + bias
    if activation == "gelu":
        z = 0.5 * z * (1.0 + lax.erf(z * jnp.float32(_INV_SQRT2)))
    return y + z if apply_skip else z


# ----------------------------------- demo / check -----------------------------------
if __name__ == "__main__":
    N, IN, OUT = 256, 128, 128          # lane-dense hidden width
    key = jax.random.PRNGKey(0)
    kx, kg, kb, kw, kbias, kw1, kb1 = jax.random.split(key, 7)

    x = jax.random.normal(kx, (N, IN), dtype=jnp.float32)
    gamma = 1.0 + 0.1 * jax.random.normal(kg, (IN,), dtype=jnp.float32)
    beta = 0.1 * jax.random.normal(kb, (IN,), dtype=jnp.float32)
    weight = 0.1 * jax.random.normal(kw, (OUT, IN), dtype=jnp.float32)
    bias = 0.1 * jax.random.normal(kbias, (OUT,), dtype=jnp.float32)

    # extra narrow-output parameters (predictor-head configuration of the GNN)
    weight1 = 0.1 * jax.random.normal(kw1, (1, IN), dtype=jnp.float32)
    bias1 = 0.1 * jax.random.normal(kb1, (1,), dtype=jnp.float32)

    configs = [
        # (weight, bias, activation, apply_skip)  -- the LinearLayer variants used in the model
        (weight, bias, "gelu", True),    # LinearLayer(H, H, 'batch', 'gelu', skip=True)
        (weight, bias, "gelu", False),   # LinearLayer(H, H, 'batch', 'gelu', skip=False)
        (weight1, bias1, "none", False), # LinearLayer(H, 1, 'batch', 'none', skip=False)
    ]

    max_err = 0.0
    for w, b, act, skip in configs:
        out = jax.block_until_ready(
            linear_layer_forward(x, gamma, beta, w, b, activation=act, apply_skip=skip))
        ref = jax.block_until_ready(
            reference_forward(x, gamma, beta, w, b, activation=act, apply_skip=skip))
        assert out.shape == ref.shape
        err = float(jnp.max(jnp.abs(out - ref)))
        max_err = max(max_err, err)
        assert jnp.allclose(out, ref, atol=1e-3, rtol=1e-3), (act, skip, err)

    print("KERNEL_OK")
</pallas_src>

<mosaic_0001>
module attributes {stable_mosaic.version = 11 : i64} {
  func.func @bn_stats_kernel(%arg0: i32, %arg1: memref<128x128xf32, #tpu.memory_space<vmem>>, %arg2: memref<2x128xf32, #tpu.memory_space<vmem>>) attributes {dimension_semantics = [#tpu.dimension_semantics<arbitrary>], iteration_bounds = array<i64: 2>, scalar_prefetch = 0 : i64, scratch_operands = 0 : i64, tpu.core_type = #tpu.core_type<tc>, window_params = [{transform_indices = @transform_0, window_bounds = array<i64: 128, 128>}, {pipeline_mode = #tpu.pipeline_mode<synchronous>, transform_indices = @transform_1, window_bounds = array<i64: 2, 128>}]} {
    %c0_i32 = arith.constant 0 : i32
    %0 = arith.cmpi eq, %arg0, %c0_i32 : i32
    %1 = arith.extui %0 : i1 to i32
    %c0_i32_0 = arith.constant 0 : i32
    %2 = arith.cmpi ne, %1, %c0_i32_0 : i32
    scf.if %2 {
      %cst_7 = arith.constant 0.000000e+00 : f32
      %13 = vector.broadcast %cst_7 : f32 to vector<2x128xf32>
      %c0_8 = arith.constant 0 : index
      %c0_9 = arith.constant 0 : index
      %14 = vector.load %arg2[%c0_8, %c0_9] : memref<2x128xf32, #tpu.memory_space<vmem>>, vector<2x128xf32>
      tpu.vector_store %arg2[%c0_8, %c0_9], %13 {strides = array<i32>} : memref<2x128xf32, #tpu.memory_space<vmem>>, vector<2x128xf32>,
    } else {
    }
    %c0 = arith.constant 0 : index
    %c0_1 = arith.constant 0 : index
    %3 = vector.load %arg1[%c0, %c0_1] : memref<128x128xf32, #tpu.memory_space<vmem>>, vector<128x128xf32>
    %cst = arith.constant dense<0.000000e+00> : vector<128xf32>
    %4 = vector.multi_reduction <add>, %3, %cst [0] : vector<128x128xf32> to vector<128xf32>
    %5 = vector.shape_cast %4 : vector<128xf32> to vector<1x128xf32>
    %6 = arith.mulf %3, %3 : vector<128x128xf32>
    %cst_2 = arith.constant dense<0.000000e+00> : vector<128xf32>
    %7 = vector.multi_reduction <add>, %6, %cst_2 [0] : vector<128x128xf32> to vector<128xf32>
    %8 = vector.shape_cast %7 : vector<128xf32> to vector<1x128xf32>
    %c0_3 = arith.constant 0 : index
    %c0_4 = arith.constant 0 : index
    %9 = vector.load %arg2[%c0_3, %c0_4] : memref<2x128xf32, #tpu.memory_space<vmem>>, vector<2x128xf32>
    %10 = tpu.concatenate %5, %8 in 0 : vector<1x128xf32>, vector<1x128xf32> -> vector<2x128xf32>
    %11 = arith.addf %9, %10 : vector<2x128xf32>
    %c0_5 = arith.constant 0 : index
    %c0_6 = arith.constant 0 : index
    %12 = vector.load %arg2[%c0_5, %c0_6] : memref<2x128xf32, #tpu.memory_space<vmem>>, vector<2x128xf32>
    tpu.vector_store %arg2[%c0_5, %c0_6], %11 {strides = array<i32>} : memref<2x128xf32, #tpu.memory_space<vmem>>, vector<2x128xf32>,
    return
  }
  func.func @transform_0(%arg0: i32) -> (i32, i32) {
    %c0_i32 = arith.constant 0 : i32
    %c0_i32_0 = arith.constant 0 : i32
    return %arg0, %c0_i32 : i32, i32
  }
  func.func @transform_1(%arg0: i32) -> (i32, i32) {
    %c0_i32 = arith.constant 0 : i32
    %c0_i32_0 = arith.constant 0 : i32
    %c0_i32_1 = arith.constant 0 : i32
    return %c0_i32, %c0_i32_0 : i32, i32
  }
}

</mosaic_0001>

<llo_original>
// kernel: tpu_custom_call.1
$region0: #{tpu_custom_call.1}
  #allocation0 [shape = 'u32[]', space=smem, size = 0x4, offset = 0x4, fixed_abs, tag = 'smem constant byte address 0x4 - core index']
  #allocation1 [shape = 'u32[144,128]{1,0:T(1,128)}', space=vmem, size = 0x12000, scoped, tag = 'internal scratch']
  %s0 = inlined_call_operand.hbm [shape: f32[256,128], index: 0, kind: input, shape index: {}]
  %s1 = inlined_call_operand.hbm [shape: f32[2,128], index: 1, kind: output, shape index: {}]
  %s2 = sld [smem:[#allocation0]]
  $region45: #{tpu_custom_call.1} parent=0
    _
  %s4 = ssub.s32 1, %s2
  %s5 = scalar_select 0, %s4, %s2
  $region1: #{tpu_custom_call.1} parent=0
    #allocation2 [shape = 'u8[131072]{0}', space=vmem, size = 0x20000, scoped, tag = 'input window, operand 0']
    #allocation3 [shape = 's32[2]{0}', space=sflag, size = 0x8, scoped, tag = 'scoped memory for tpu_custom_call.1']
    #allocation4 [shape = 's32[2]{0}', space=sflag, size = 0x8, scoped, tag = 'scoped memory for tpu_custom_call.1']
    #allocation5 [shape = 'u8[1024]{0}', space=vmem, size = 0x400, scoped, tag = 'output window, operand 0, single buffered']
    %6 = vsyncpa [#allocation3], 0
    %s7 = scalar_lea.sflag [#allocation3], 1
    %8 = vsyncpa %s7, 0
    %9 = vsyncpa [#allocation4], 0
    loop: start=0, step=1, limit=4
    $region2: #{tpu_custom_call.1} parent=1 // loop_pre_header
      _
    $region3: #{tpu_custom_call.1} parent=1 // loop_header
      %s11 = sphi 0, %s15
      %p12 = scmp.ge.s32.totalorder %s11, 4
      %s21 = sphi 0, %s23
      %s24 = sphi 0, %s21
      %s25 = sphi 0, %s24
      %s41 = sphi 0, %s25
      %s45 = sphi 0, %s45
      %s47 = sphi 0, %s45
      %s48 = sphi 0, %s47
      %s62 = sphi 0, %s48
    $region4: #{tpu_custom_call.1} parent=1 // loop_header_branch
      %14 = sbr.rel (%p12) target = $region8
    $region5: #{tpu_custom_call.1} parent=1 // loop_body
      %s16 = ssub.s32 %s11, 1
      %s17 = ssub.s32 %s11, 2
      %s18 = sadd.s32 %s11, 1
      %s19 = ssub.s32 %s11, %s18
      %p20 = scmp.eq.s32.totalorder %s19, 0
      %s22 = sadd.s32 %s21, 1
      %s23 = scalar_select %p20, %s21, %s22
      %p26 = pneg %p20
      %p27 = scmp.eq.s32.totalorder %s11, 1
      %p28 = por %p26, %p27
      %p29 = scmp.ne.s32.totalorder %s21, %s24
      %p30 = scmp.eq.s32.totalorder %s11, 0
      %p31 = por %p29, %p30
      %p32 = scmp.ne.s32.totalorder %s21, %s24
      %p33 = scmp.eq.s32.totalorder %s16, 1
      %p34 = por %p32, %p33
      %p35 = scmp.ne.s32.totalorder %s24, %s25
      %p36 = scmp.eq.s32.totalorder %s16, 0
      %p37 = por %p35, %p36
      %p38 = scmp.ne.s32.totalorder %s24, %s25
      %p39 = scmp.eq.s32.totalorder %s17, 1
      %p40 = por %p38, %p39
      %p42 = scmp.ne.s32.totalorder %s25, %s41
      %p43 = scmp.eq.s32.totalorder %s17, 0
      %p44 = por %p42, %p43
      %s46 = sadd.s32 %s45, 1
      %p49 = scmp.eq.s32.totalorder %s11, 1
      %p50 = scmp.ne.s32.totalorder %s45, %s47
      %p51 = scmp.eq.s32.totalorder %s11, 0
      %p52 = por %p50, %p51
      %p53 = scmp.ne.s32.totalorder %s45, %s47
      %p54 = scmp.eq.s32.totalorder %s16, 1
      %p55 = por %p53, %p54
      %p56 = scmp.ne.s32.totalorder %s47, %s48
      %p57 = scmp.eq.s32.totalorder %s16, 0
      %p58 = por %p56, %p57
      %p59 = scmp.ne.s32.totalorder %s47, %s48
      %p60 = scmp.eq.s32.totalorder %s17, 1
      %p61 = por %p59, %p60
      %p63 = scmp.ne.s32.totalorder %s48, %s62
      %p64 = scmp.eq.s32.totalorder %s17, 0
      %p65 = por %p63, %p64
      %p66 = scmp.le.s32.totalorder 1, %s11
      %p67 = scmp.lt.s32.totalorder %s11, 3
      %p68 = pnand %p66, %p67
      %p69 = pneg %p68
      // Predicated region
      $region9: #{tpu_custom_call.1} parent=5 // pred_check
        _
      $region10: #{tpu_custom_call.1} parent=5 // pred_check_branch
        %71 = sbr.rel (%p68) target = $region12
      $region11: #{tpu_custom_call.1} parent=5 // pred_region
        %s72 = ssub.s32 %s11, 1
      $region12: #{tpu_custom_call.1} parent=5 // pred_fallthru
        _
      %p73 = scmp.lt.s32.totalorder %s11, 2
      // Predicated region
      $region13: #{tpu_custom_call.1} parent=5 // pred_check
        %p74 = pneg %p73
      $region14: #{tpu_custom_call.1} parent=5 // pred_check_branch
        %76 = sbr.rel (%p74) target = $region16
      $region15: #{tpu_custom_call.1} parent=5 // pred_region
        // Predicated region
        $region17: #{tpu_custom_call.1} parent=15 // pred_check
          %p77 = pneg %p31
        $region18: #{tpu_custom_call.1} parent=15 // pred_check_branch
          %79 = sbr.rel (%p77) target = $region20
        $region19: #{tpu_custom_call.1} parent=15 // pred_region
          %s80 = sand.u32 %s21, 1
          %s81 = scalar_lea.sflag [#allocation3], %s80
          %s82 = sand.u32 %s21, 1
          %s83 = smul.addr %s82, 128
          %s84 = scalar_lea.vmem [#allocation2], %s83
          %s85 = smul.u32 16, %s11
          %s87 = ssub.s32 2048, 2048
          %88 = vsyncadd %s81, %s87
          %s89 = smul.addr %s85, 128
          %s90 = scalar_lea.hbm %s0, %s89
          %s91 = sshll.u32 %s84, 4
          %s92 = int_to_ptr.vmem [resolvable:$true] %s91
          %97 = dma.hbm_to_vmem [thread:$0]  %s90, 2048, %s92, %s81, 128, 128, 8
        $region20: #{tpu_custom_call.1} parent=15 // pred_fallthru
          _
      $region16: #{tpu_custom_call.1} parent=5 // pred_fallthru
        _
      %p98 = scmp.le.s32.totalorder 1, %s11
      %p99 = scmp.lt.s32.totalorder %s11, 3
      %p100 = pnand %p98, %p99
      %p101 = pneg %p100
      // Predicated region
      $region21: #{tpu_custom_call.1} parent=5 // pred_check
        _
      $region22: #{tpu_custom_call.1} parent=5 // pred_check_branch
        %103 = sbr.rel (%p100) target = $region24
      $region23: #{tpu_custom_call.1} parent=5 // pred_region
        %s104 = ssub.s32 %s11, 1
        %s105 = sand.u32 %s24, 1
        %s106 = scalar_lea.sflag [#allocation3], %s105
        %s107 = sand.u32 %s24, 1
        %s108 = smul.addr %s107, 128
        %s109 = scalar_lea.vmem [#allocation2], %s108
        // Predicated region
        $region25: #{tpu_custom_call.1} parent=23 // pred_check
          %p110 = pneg %p37
        $region26: #{tpu_custom_call.1} parent=23 // pred_check_branch
          %112 = sbr.rel (%p110) target = $region28
        $region27: #{tpu_custom_call.1} parent=23 // pred_region
          %113 = dma.done %s106, 2048
        $region28: #{tpu_custom_call.1} parent=23 // pred_fallthru
          _
        %s114 = sand.u32 %s24, 1
        %s115 = scalar_lea.sflag [#allocation3], %s114
        %s116 = sand.u32 %s24, 1
        %s117 = smul.addr %s116, 128
        %s118 = scalar_lea.vmem [#allocation2], %s117
        %p119 = pneg %p37
        %p120 = pneg %p34
        %p121 = pneg %p58
        %p122 = pneg %p55
        %s123 = smul.u32 16, %s16
        %p124 = scmp.eq.s32.totalorder %s16, 0
        // Predicated region
        $region29: #{tpu_custom_call.1} parent=23 // pred_check
          %p125 = pneg %p124
        $region30: #{tpu_custom_call.1} parent=23 // pred_check_branch
          %127 = sbr.rel (%p125) target = $region32
        $region31: #{tpu_custom_call.1} parent=23 // pred_region
          %128 = vst [vmem:[#allocation5] sm:$0x3] 0.0
        $region32: #{tpu_custom_call.1} parent=23 // pred_fallthru
          _
        %v129 = vld [vmem:[%s109] sm:$0xff]
        %v130 = vld [vmem:[%s109 + $0x8] sm:$0xff]
        %v131 = vld [vmem:[%s109 + $0x10] sm:$0xff]
        %v132 = vld [vmem:[%s109 + $0x18] sm:$0xff]
        %v133 = vld [vmem:[%s109 + $0x20] sm:$0xff]
        %v134 = vld [vmem:[%s109 + $0x28] sm:$0xff]
        %v135 = vld [vmem:[%s109 + $0x30] sm:$0xff]
        %v136 = vld [vmem:[%s109 + $0x38] sm:$0xff]
        %v137 = vld [vmem:[%s109 + $0x40] sm:$0xff]
        %v138 = vld [vmem:[%s109 + $0x48] sm:$0xff]
        %v139 = vld [vmem:[%s109 + $0x50] sm:$0xff]
        %v140 = vld [vmem:[%s109 + $0x58] sm:$0xff]
        %v141 = vld [vmem:[%s109 + $0x60] sm:$0xff]
        %v142 = vld [vmem:[%s109 + $0x68] sm:$0xff]
        %v143 = vld [vmem:[%s109 + $0x70] sm:$0xff]
        %v144 = vld [vmem:[%s109 + $0x78] sm:$0xff]
        %v145 = vadd.f32 %v129, %v130
        %v146 = vadd.f32 %v145, %v131
        %v147 = vadd.f32 %v146, %v132
        %v148 = vadd.f32 %v147, %v133
        %v149 = vadd.f32 %v148, %v134
        %v150 = vadd.f32 %v149, %v135
        %v151 = vadd.f32 %v150, %v136
        %v152 = vadd.f32 %v151, %v137
        %v153 = vadd.f32 %v152, %v138
        %v154 = vadd.f32 %v153, %v139
        %v155 = vadd.f32 %v154, %v140
        %v156 = vadd.f32 %v155, %v141
        %v157 = vadd.f32 %v156, %v142
        %v158 = vadd.f32 %v157, %v143
        %v159 = vadd.f32 %v158, %v144
        %v160 = vrot.slane %v159, 4
        %v161 = vadd.f32 %v159, %v160
        %v162 = vrot.slane %v161, 2
        %v163 = vadd.f32 %v161, %v162
        %v164 = vrot.slane %v163, 1
        %v165 = vadd.f32 %v163, %v164
        %v166 = vmul.f32 %v129, %v129
        %v167 = vmul.f32 %v130, %v130
        %v168 = vmul.f32 %v131, %v131
        %v169 = vmul.f32 %v132, %v132
        %v170 = vmul.f32 %v133, %v133
        %v171 = vmul.f32 %v134, %v134
        %v172 = vmul.f32 %v135, %v135
        %v173 = vmul.f32 %v136, %v136
        %v174 = vmul.f32 %v137, %v137
        %v175 = vmul.f32 %v138, %v138
        %v176 = vmul.f32 %v139, %v139
        %v177 = vmul.f32 %v140, %v140
        %v178 = vmul.f32 %v141, %v141
        %v179 = vmul.f32 %v142, %v142
        %v180 = vmul.f32 %v143, %v143
        %v181 = vmul.f32 %v144, %v144
        %v182 = vadd.f32 %v166, %v167
        %v183 = vadd.f32 %v182, %v168
        %v184 = vadd.f32 %v183, %v169
        %v185 = vadd.f32 %v184, %v170
        %v186 = vadd.f32 %v185, %v171
        %v187 = vadd.f32 %v186, %v172
        %v188 = vadd.f32 %v187, %v173
        %v189 = vadd.f32 %v188, %v174
        %v190 = vadd.f32 %v189, %v175
        %v191 = vadd.f32 %v190, %v176
        %v192 = vadd.f32 %v191, %v177
        %v193 = vadd.f32 %v192, %v178
        %v194 = vadd.f32 %v193, %v179
        %v195 = vadd.f32 %v194, %v180
        %v196 = vadd.f32 %v195, %v181
        %v197 = vrot.slane %v196, 4
        %v198 = vadd.f32 %v196, %v197
        %v199 = vrot.slane %v198, 2
        %v200 = vadd.f32 %v198, %v199
        %v201 = vrot.slane %v200, 1
        %v202 = vadd.f32 %v200, %v201
        %v203 = vld [vmem:[#allocation5] sm:$0x3]
        %vm204 = vcmask 1040384
        %v205 = vsel %vm204, %v165, %v202
        %v206 = vadd.f32 %v203, %v205
        %207 = vst [vmem:[#allocation5] sm:$0x3] %v206
        // Predicated region
        $region33: #{tpu_custom_call.1} parent=23 // pred_check
          %p208 = pneg %p55
        $region34: #{tpu_custom_call.1} parent=23 // pred_check_branch
          %210 = sbr.rel (%p208) target = $region36
        $region35: #{tpu_custom_call.1} parent=23 // pred_region
          %s212 = ssub.s32 32, 32
          %213 = vsyncadd [#allocation4], %s212
          %s215 = sshll.u32 [#allocation5], 4
          %s216 = int_to_ptr.vmem [resolvable:$true] %s215
          %218 = dma.vmem_to_hbm [thread:$0]  %s216, 32, %s1, [#allocation4]
        $region36: #{tpu_custom_call.1} parent=23 // pred_fallthru
          _
        // Predicated region
        $region37: #{tpu_custom_call.1} parent=23 // pred_check
          %p219 = pneg %p55
        $region38: #{tpu_custom_call.1} parent=23 // pred_check_branch
          %221 = sbr.rel (%p219) target = $region40
        $region39: #{tpu_custom_call.1} parent=23 // pred_region
          %222 = dma.done [#allocation4], 32
        $region40: #{tpu_custom_call.1} parent=23 // pred_fallthru
          _
      $region24: #{tpu_custom_call.1} parent=5 // pred_fallthru
        _
      %p223 = scmp.le.s32.totalorder 2, %s11
      // Predicated region
      $region41: #{tpu_custom_call.1} parent=5 // pred_check
        %p224 = pneg %p223
      $region42: #{tpu_custom_call.1} parent=5 // pred_check_branch
        %226 = sbr.rel (%p224) target = $region44
      $region43: #{tpu_custom_call.1} parent=5 // pred_region
        %s227 = ssub.s32 %s11, 2
      $region44: #{tpu_custom_call.1} parent=5 // pred_fallthru
        _
    $region6: #{tpu_custom_call.1} parent=1 // loop_footer
      %s15 = sadd.s32 1, %s11
    $region7: #{tpu_custom_call.1} parent=1 // loop_footer_branch
      %10 = sbr.rel target = $region3
    $region8: #{tpu_custom_call.1} parent=1 // loop_exit
      _
    %228 = vsyncpa [#allocation3], 1
    %s229 = scalar_lea.sflag [#allocation3], 1
    %230 = vsyncpa %s229, 1
    %231 = vsyncpa [#allocation4], 1
    %s232 = scalar_lea.sflag [#allocation4], 1
    %233 = vsyncpa %s232, 1

</llo_original>
